<compile_context>
chip_gen: v5e
topology: v5e:2x2
jax: 0.10.0
libtpu: 0.0.40
codegen_flags: <defaults>
</compile_context>

<pallas_src>
import functools

import jax
import jax.numpy as jnp
from jax import lax
from jax.experimental import pallas as pl
from jax.experimental.pallas import tpu as pltpu


def lstm_head_kernel(x_ref, wih_ref, whh_ref, b_ref, wout_ref, bout_ref,
                     o_ref, xg_ref, *, bf16_gates):
    # x_ref   : [T, B, D]       bf16  (channel mean already applied; D on lanes)
    # wih_ref : [D, 4D]         bf16  (input->hidden, transposed)
    # whh_ref : [D, 4D]         bf16  (hidden->hidden, transposed)
    # b_ref   : [1, 4D]         f32   (b_ih + b_hh)
    # wout_ref: [D, n_classes]  f32
    # bout_ref: [1, n_classes]  f32
    # o_ref   : [B, n_classes]  f32
    # xg_ref  : VMEM scratch [T, B, 4D] bf16 (precomputed input projections)
    T, B, D = x_ref.shape
    G = 4 * D

    # Hoist the input projection out of the recurrence: one [T*B, D] @ [D, 4D]
    # MXU matmul instead of T small per-step matmuls. Stored in bf16 (it is a
    # bf16 x bf16 product already, so rounding is at bf16 level either way).
    xg = jnp.dot(x_ref[...].reshape(T * B, D), wih_ref[...],
                 preferred_element_type=jnp.float32)
    xg_ref[...] = xg.reshape(T, B, G).astype(jnp.bfloat16)

    # Recurrent weight + gate bias stay resident across the whole recurrence.
    # TODO(synk): on v5e, pin Whh in the MXU staging registers via
    # pltpu.matmul_push_rhs / matmul_acc_lhs / matmul_pop instead of relying
    # on the compiler to hoist the per-step RHS push.
    whh = whh_ref[...]                                    # [D, 4D] bf16
    b_row = b_ref[...]                                    # [1, 4D] f32

    def step(t, carry):
        h, c = carry                                      # [B, D] f32 each
        gates = (xg_ref[t].astype(jnp.float32) + b_row
                 + jnp.dot(h.astype(jnp.bfloat16), whh,
                           preferred_element_type=jnp.float32))   # [B, 4D] f32
        # Gate slices are lane-aligned whenever D % 128 == 0 (typical d_model).
        if bf16_gates:
            # v6e/v7x: bf16 EUP roughly doubles transcendental throughput on
            # the binding slot of the serialized recurrence.
            g = gates.astype(jnp.bfloat16)
            i_g = jax.nn.sigmoid(g[:, 0 * D:1 * D]).astype(jnp.float32)
            f_g = jax.nn.sigmoid(g[:, 1 * D:2 * D]).astype(jnp.float32)
            g_g = jnp.tanh(g[:, 2 * D:3 * D]).astype(jnp.float32)
            o_g = jax.nn.sigmoid(g[:, 3 * D:4 * D]).astype(jnp.float32)
        else:
            # v5e: no bf16 VPU/EUP, keep f32.
            i_g = jax.nn.sigmoid(gates[:, 0 * D:1 * D])
            f_g = jax.nn.sigmoid(gates[:, 1 * D:2 * D])
            g_g = jnp.tanh(gates[:, 2 * D:3 * D])
            o_g = jax.nn.sigmoid(gates[:, 3 * D:4 * D])
        c_new = f_g * c + i_g * g_g                       # state stays f32
        if bf16_gates:
            tanh_c = jnp.tanh(c_new.astype(jnp.bfloat16)).astype(jnp.float32)
        else:
            tanh_c = jnp.tanh(c_new)
        h_new = o_g * tanh_c
        return h_new, c_new

    h0 = jnp.zeros((B, D), jnp.float32)
    c0 = jnp.zeros((B, D), jnp.float32)
    # Unroll sized against vreg pressure (carries = 2 * B * D f32 vregs).
    if T <= 8:
        unroll = True
    elif B <= 128:
        unroll = 4
    else:
        unroll = 2
    h_last, _ = lax.fori_loop(0, T, step, (h0, c0), unroll=unroll)

    # Final linear head on the last timestep's hidden state (tiny matmul,
    # off the hot recurrent path, kept in f32).
    o_ref[...] = (jnp.dot(h_last, wout_ref[...],
                          preferred_element_type=jnp.float32)
                  + bout_ref[...])


def _round_up(a, m):
    return (a + m - 1) // m * m


def _cdiv(a, b):
    return -(-a // b)


def _choose_bt(B, max_b_tile, min_tiles):
    # Balanced tiling: minimize padding waste subject to bt <= max_b_tile and
    # at least `min_tiles` grid programs (so both v7x TensorCores get work).
    n_tiles = max(_cdiv(B, max_b_tile), min_tiles)
    return _round_up(_cdiv(B, n_tiles), 8)


def _vmem_limit_bytes(T, bt, D, n_classes):
    # Size the limit from the real footprint, capped by physical VMEM.
    x_tile = T * bt * D * 2                          # bf16, double-buffered
    xg = T * bt * 4 * D * 2                          # bf16 scratch (resident)
    weights = (2 * D * 4 * D) * 2 + 4 * D * 4 + D * n_classes * 4 + n_classes * 4
    out_tile = bt * n_classes * 4
    need = 2 * x_tile + xg + 2 * (weights + out_tile)
    need = int(need * 1.5) + (16 << 20)              # carries / temps / slack
    try:
        cap = pltpu.get_tpu_info().vmem_capacity_bytes
    except Exception:
        cap = 64 << 20                               # assume smallest (v7x)
    return max(32 << 20, min(need, cap * 4 // 5))


@functools.partial(jax.jit, static_argnames=("max_b_tile",))
def lstm_head_forward(x, w_ih, w_hh, b_ih, b_hh, w_out, b_out, *,
                      max_b_tile=128):
    """x: [bs, nvars, d_model, num_patch] (PyTorch layout). Returns [bs, n_classes]."""
    B, C, D, T = x.shape
    n_classes = w_out.shape[0]

    kind = ""
    try:
        kind = jax.devices()[0].device_kind.lower()
    except Exception:
        pass
    bf16_gates = ("v6" in kind) or ("v7" in kind)    # v5e has no bf16 VPU/EUP
    num_cores = 2 if "v7" in kind else 1             # v7x: 2 TensorCores/chip

    min_tiles = num_cores if B >= 8 * num_cores else 1
    bt = _choose_bt(B, max_b_tile, min_tiles)
    B_pad = _round_up(B, bt)

    # Fold the channel mean into the layout pass the wrapper already does:
    # f32 accumulation for the mean, then a single transposed bf16 copy
    # [T, B, D] (time-major, D on lanes) is what the kernel streams.
    z = jnp.mean(x.astype(jnp.float32), axis=1)                  # [B, D, T]
    x_tm = jnp.transpose(z, (2, 0, 1)).astype(jnp.bfloat16)      # [T, B, D]
    if B_pad != B:
        x_tm = jnp.pad(x_tm, ((0, 0), (0, B_pad - B), (0, 0)))

    wih_t = jnp.transpose(w_ih).astype(jnp.bfloat16)             # [D, 4D]
    whh_t = jnp.transpose(w_hh).astype(jnp.bfloat16)             # [D, 4D]
    b_gates = (b_ih + b_hh).reshape(1, 4 * D).astype(jnp.float32)
    wout_t = jnp.transpose(w_out).astype(jnp.float32)            # [D, n_classes]
    bout = b_out.reshape(1, n_classes).astype(jnp.float32)

    kernel = functools.partial(lstm_head_kernel, bf16_gates=bf16_gates)
    grid = (B_pad // bt,)
    out = pl.pallas_call(
        kernel,
        out_shape=jax.ShapeDtypeStruct((B_pad, n_classes), jnp.float32),
        grid=grid,
        in_specs=[
            pl.BlockSpec((T, bt, D), lambda i: (0, i, 0)),        # x tile
            # TODO(synk): mark the resident-weight specs below with
            # pipeline_mode=pl.Buffered(1) to skip pointless double-buffering.
            pl.BlockSpec((D, 4 * D), lambda i: (0, 0)),           # W_ih (resident)
            pl.BlockSpec((D, 4 * D), lambda i: (0, 0)),           # W_hh (resident)
            pl.BlockSpec((1, 4 * D), lambda i: (0, 0)),           # gate bias
            pl.BlockSpec((D, n_classes), lambda i: (0, 0)),       # W_out
            pl.BlockSpec((1, n_classes), lambda i: (0, 0)),       # b_out
        ],
        out_specs=pl.BlockSpec((bt, n_classes), lambda i: (i, 0)),
        scratch_shapes=[pltpu.VMEM((T, bt, 4 * D), jnp.bfloat16)],  # Xg scratch
        compiler_params=pltpu.CompilerParams(
            dimension_semantics=("parallel",),       # megacore / 2 TCs on v7x
            vmem_limit_bytes=_vmem_limit_bytes(T, bt, D, n_classes),
        ),
    )(x_tm, wih_t, whh_t, b_gates, wout_t, bout)
    return out[:B]


def lstm_head_reference(x, w_ih, w_hh, b_ih, b_hh, w_out, b_out):
    """Pure-JAX f32 reference matching torch.nn.LSTM + Linear semantics."""
    B, C, D, T = x.shape
    z = jnp.mean(x, axis=1)                 # [B, D, T]
    z = jnp.transpose(z, (0, 2, 1))         # [B, T, D]
    h = jnp.zeros((B, D), jnp.float32)
    c = jnp.zeros((B, D), jnp.float32)
    for t in range(T):
        gates = z[:, t, :] @ w_ih.T + b_ih + h @ w_hh.T + b_hh
        i_g = jax.nn.sigmoid(gates[:, 0 * D:1 * D])
        f_g = jax.nn.sigmoid(gates[:, 1 * D:2 * D])
        g_g = jnp.tanh(gates[:, 2 * D:3 * D])
        o_g = jax.nn.sigmoid(gates[:, 3 * D:4 * D])
        c = f_g * c + i_g * g_g
        h = o_g * jnp.tanh(c)
    return h @ w_out.T + b_out


if __name__ == "__main__":
    # Small shapes consistent with the forward: [bs, nvars, d_model, num_patch]
    B, C, D, T = 2, 4, 32, 8
    n_classes = 5

    key = jax.random.PRNGKey(0)
    keys = jax.random.split(key, 8)
    x = jax.random.normal(keys[0], (B, C, D, T), dtype=jnp.float32)

    # Deterministic parameter init (uniform, ~PyTorch's 1/sqrt(hidden) scale).
    s = 1.0 / jnp.sqrt(jnp.float32(D))
    w_ih = jax.random.uniform(keys[1], (4 * D, D), jnp.float32, -s, s)
    w_hh = jax.random.uniform(keys[2], (4 * D, D), jnp.float32, -s, s)
    b_ih = jax.random.uniform(keys[3], (4 * D,), jnp.float32, -s, s)
    b_hh = jax.random.uniform(keys[4], (4 * D,), jnp.float32, -s, s)
    w_out = jax.random.uniform(keys[5], (n_classes, D), jnp.float32, -s, s)
    b_out = jax.random.uniform(keys[6], (n_classes,), jnp.float32, -s, s)

    y = lstm_head_forward(x, w_ih, w_hh, b_ih, b_hh, w_out, b_out)
    y = jax.block_until_ready(y)

    y_ref = lstm_head_reference(x, w_ih, w_hh, b_ih, b_hh, w_out, b_out)
    assert y.shape == (B, n_classes), y.shape
    # bf16 MXU operands (+ bf16 gate nonlinearities on v6e/v7x) with f32
    # state/accumulation -> bf16-level tolerance.
    max_err = float(jnp.max(jnp.abs(y - y_ref)))
    assert jnp.allclose(y, y_ref, rtol=5e-2, atol=5e-2), (max_err, y, y_ref)

    print("KERNEL_OK")
</pallas_src>

<mosaic_0001>
module attributes {stable_mosaic.version = 11 : i64} {
  func.func @lstm_head_kernel(%arg0: i32, %arg1: memref<8x8x32xbf16, #tpu.memory_space<vmem>>, %arg2: memref<32x128xbf16, #tpu.memory_space<vmem>>, %arg3: memref<32x128xbf16, #tpu.memory_space<vmem>>, %arg4: memref<1x128xf32, #tpu.memory_space<vmem>>, %arg5: memref<32x5xf32, #tpu.memory_space<vmem>>, %arg6: memref<1x5xf32, #tpu.memory_space<vmem>>, %arg7: memref<8x5xf32, #tpu.memory_space<vmem>>, %arg8: memref<8x8x128xbf16, #tpu.memory_space<vmem>>) attributes {dimension_semantics = [#tpu.dimension_semantics<parallel>], iteration_bounds = array<i64: 1>, scalar_prefetch = 0 : i64, scratch_operands = 1 : i64, tpu.core_type = #tpu.core_type<tc>, window_params = [{transform_indices = @transform_0, window_bounds = array<i64: 8, 8, 32>}, {pipeline_mode = #tpu.pipeline_mode<synchronous>, transform_indices = @transform_1, window_bounds = array<i64: 32, 128>}, {pipeline_mode = #tpu.pipeline_mode<synchronous>, transform_indices = @transform_2, window_bounds = array<i64: 32, 128>}, {pipeline_mode = #tpu.pipeline_mode<synchronous>, transform_indices = @transform_3, window_bounds = array<i64: 1, 128>}, {pipeline_mode = #tpu.pipeline_mode<synchronous>, transform_indices = @transform_4, window_bounds = array<i64: 32, 5>}, {pipeline_mode = #tpu.pipeline_mode<synchronous>, transform_indices = @transform_5, window_bounds = array<i64: 1, 5>}, {transform_indices = @transform_6, window_bounds = array<i64: 8, 5>}]} {
    %c0 = arith.constant 0 : index
    %c0_0 = arith.constant 0 : index
    %c0_1 = arith.constant 0 : index
    %0 = vector.load %arg1[%c0, %c0_0, %c0_1] : memref<8x8x32xbf16, #tpu.memory_space<vmem>>, vector<8x8x32xbf16>
    %1 = vector.shape_cast %0 : vector<8x8x32xbf16> to vector<64x32xbf16>
    %c0_2 = arith.constant 0 : index
    %c0_3 = arith.constant 0 : index
    %2 = vector.load %arg2[%c0_2, %c0_3] : memref<32x128xbf16, #tpu.memory_space<vmem>>, vector<32x128xbf16>
    %cst = arith.constant dense<0.000000e+00> : vector<64x128xf32>
    %3 = tpu.matmul %1, %2, %cst {dimension_numbers = #tpu.dot_dimension_numbers<[1], [0], [0], [1], [0, 0, 1, 1], [], []>} : vector<64x32xbf16>, vector<32x128xbf16>, vector<64x128xf32> -> vector<64x128xf32>
    %4 = vector.shape_cast %3 : vector<64x128xf32> to vector<8x8x128xf32>
    %5 = arith.truncf %4 : vector<8x8x128xf32> to vector<8x8x128xbf16>
    %c0_4 = arith.constant 0 : index
    %c0_5 = arith.constant 0 : index
    %c0_6 = arith.constant 0 : index
    %6 = vector.load %arg8[%c0_4, %c0_5, %c0_6] : memref<8x8x128xbf16, #tpu.memory_space<vmem>>, vector<8x8x128xbf16>
    tpu.vector_store %arg8[%c0_4, %c0_5, %c0_6], %5 {strides = array<i32>} : memref<8x8x128xbf16, #tpu.memory_space<vmem>>, vector<8x8x128xbf16>,
    %c0_7 = arith.constant 0 : index
    %c0_8 = arith.constant 0 : index
    %7 = vector.load %arg3[%c0_7, %c0_8] : memref<32x128xbf16, #tpu.memory_space<vmem>>, vector<32x128xbf16>
    %c0_9 = arith.constant 0 : index
    %c0_10 = arith.constant 0 : index
    %8 = vector.load %arg4[%c0_9, %c0_10] : memref<1x128xf32, #tpu.memory_space<vmem>>, vector<1x128xf32>
    %cst_11 = arith.constant 0.000000e+00 : f32
    %9 = vector.broadcast %cst_11 : f32 to vector<8x32xf32>
    %cst_12 = arith.constant 0.000000e+00 : f32
    %10 = vector.broadcast %cst_12 : f32 to vector<8x32xf32>
    %c0_i32 = arith.constant 0 : i32
    %11 = arith.index_cast %c0_i32 : i32 to index
    %c0_13 = arith.constant 0 : index
    %c0_14 = arith.constant 0 : index
    %12 = vector.load %arg8[%11, %c0_13, %c0_14] : memref<8x8x128xbf16, #tpu.memory_space<vmem>>, vector<1x8x128xbf16>
    %13 = vector.shape_cast %12 : vector<1x8x128xbf16> to vector<8x128xbf16>
    %14 = arith.extf %13 : vector<8x128xbf16> to vector<8x128xf32>
    %15 = vector.broadcast %8 : vector<1x128xf32> to vector<8x128xf32>
    %16 = arith.addf %14, %15 : vector<8x128xf32>
    %17 = arith.truncf %9 : vector<8x32xf32> to vector<8x32xbf16>
    %cst_15 = arith.constant dense<0.000000e+00> : vector<8x128xf32>
    %18 = tpu.matmul %17, %7, %cst_15 {dimension_numbers = #tpu.dot_dimension_numbers<[1], [0], [0], [1], [0, 0, 1, 1], [], []>} : vector<8x32xbf16>, vector<32x128xbf16>, vector<8x128xf32> -> vector<8x128xf32>
    %19 = arith.addf %16, %18 : vector<8x128xf32>
    %20 = vector.extract_strided_slice %19 {offsets = [0, 0], sizes = [8, 32], strides = [1, 1]} : vector<8x128xf32> to vector<8x32xf32>
    %21 = arith.negf %20 : vector<8x32xf32>
    %22 = math.exp %21 : vector<8x32xf32>
    %cst_16 = arith.constant 1.000000e+00 : f32
    %23 = vector.broadcast %cst_16 : f32 to vector<8x32xf32>
    %24 = arith.addf %23, %22 : vector<8x32xf32>
    %25 = arith.divf %23, %24 : vector<8x32xf32>
    %26 = vector.extract_strided_slice %19 {offsets = [0, 32], sizes = [8, 32], strides = [1, 1]} : vector<8x128xf32> to vector<8x32xf32>
    %27 = arith.negf %26 : vector<8x32xf32>
    %28 = math.exp %27 : vector<8x32xf32>
    %cst_17 = arith.constant 1.000000e+00 : f32
    %29 = vector.broadcast %cst_17 : f32 to vector<8x32xf32>
    %30 = arith.addf %29, %28 : vector<8x32xf32>
    %31 = arith.divf %29, %30 : vector<8x32xf32>
    %32 = vector.extract_strided_slice %19 {offsets = [0, 64], sizes = [8, 32], strides = [1, 1]} : vector<8x128xf32> to vector<8x32xf32>
    %33 = math.tanh %32 : vector<8x32xf32>
    %34 = vector.extract_strided_slice %19 {offsets = [0, 96], sizes = [8, 32], strides = [1, 1]} : vector<8x128xf32> to vector<8x32xf32>
    %35 = arith.negf %34 : vector<8x32xf32>
    %36 = math.exp %35 : vector<8x32xf32>
    %cst_18 = arith.constant 1.000000e+00 : f32
    %37 = vector.broadcast %cst_18 : f32 to vector<8x32xf32>
    %38 = arith.addf %37, %36 : vector<8x32xf32>
    %39 = arith.divf %37, %38 : vector<8x32xf32>
    %40 = arith.mulf %31, %10 : vector<8x32xf32>
    %41 = arith.mulf %25, %33 : vector<8x32xf32>
    %42 = arith.addf %40, %41 : vector<8x32xf32>
    %43 = math.tanh %42 : vector<8x32xf32>
    %44 = arith.mulf %39, %43 : vector<8x32xf32>
    %c1_i32 = arith.constant 1 : i32
    %45 = arith.index_cast %c1_i32 : i32 to index
    %c0_19 = arith.constant 0 : index
    %c0_20 = arith.constant 0 : index
    %46 = vector.load %arg8[%45, %c0_19, %c0_20] : memref<8x8x128xbf16, #tpu.memory_space<vmem>>, vector<1x8x128xbf16>
    %47 = vector.shape_cast %46 : vector<1x8x128xbf16> to vector<8x128xbf16>
    %48 = arith.extf %47 : vector<8x128xbf16> to vector<8x128xf32>
    %49 = vector.broadcast %8 : vector<1x128xf32> to vector<8x128xf32>
    %50 = arith.addf %48, %49 : vector<8x128xf32>
    %51 = arith.truncf %44 : vector<8x32xf32> to vector<8x32xbf16>
    %cst_21 = arith.constant dense<0.000000e+00> : vector<8x128xf32>
    %52 = tpu.matmul %51, %7, %cst_21 {dimension_numbers = #tpu.dot_dimension_numbers<[1], [0], [0], [1], [0, 0, 1, 1], [], []>} : vector<8x32xbf16>, vector<32x128xbf16>, vector<8x128xf32> -> vector<8x128xf32>
    %53 = arith.addf %50, %52 : vector<8x128xf32>
    %54 = vector.extract_strided_slice %53 {offsets = [0, 0], sizes = [8, 32], strides = [1, 1]} : vector<8x128xf32> to vector<8x32xf32>
    %55 = arith.negf %54 : vector<8x32xf32>
    %56 = math.exp %55 : vector<8x32xf32>
    %cst_22 = arith.constant 1.000000e+00 : f32
    %57 = vector.broadcast %cst_22 : f32 to vector<8x32xf32>
    %58 = arith.addf %57, %56 : vector<8x32xf32>
    %59 = arith.divf %57, %58 : vector<8x32xf32>
    %60 = vector.extract_strided_slice %53 {offsets = [0, 32], sizes = [8, 32], strides = [1, 1]} : vector<8x128xf32> to vector<8x32xf32>
    %61 = arith.negf %60 : vector<8x32xf32>
    %62 = math.exp %61 : vector<8x32xf32>
    %cst_23 = arith.constant 1.000000e+00 : f32
    %63 = vector.broadcast %cst_23 : f32 to vector<8x32xf32>
    %64 = arith.addf %63, %62 : vector<8x32xf32>
    %65 = arith.divf %63, %64 : vector<8x32xf32>
    %66 = vector.extract_strided_slice %53 {offsets = [0, 64], sizes = [8, 32], strides = [1, 1]} : vector<8x128xf32> to vector<8x32xf32>
    %67 = math.tanh %66 : vector<8x32xf32>
    %68 = vector.extract_strided_slice %53 {offsets = [0, 96], sizes = [8, 32], strides = [1, 1]} : vector<8x128xf32> to vector<8x32xf32>
    %69 = arith.negf %68 : vector<8x32xf32>
    %70 = math.exp %69 : vector<8x32xf32>
    %cst_24 = arith.constant 1.000000e+00 : f32
    %71 = vector.broadcast %cst_24 : f32 to vector<8x32xf32>
    %72 = arith.addf %71, %70 : vector<8x32xf32>
    %73 = arith.divf %71, %72 : vector<8x32xf32>
    %74 = arith.mulf %65, %42 : vector<8x32xf32>
    %75 = arith.mulf %59, %67 : vector<8x32xf32>
    %76 = arith.addf %74, %75 : vector<8x32xf32>
    %77 = math.tanh %76 : vector<8x32xf32>
    %78 = arith.mulf %73, %77 : vector<8x32xf32>
    %c2_i32 = arith.constant 2 : i32
    %79 = arith.index_cast %c2_i32 : i32 to index
    %c0_25 = arith.constant 0 : index
    %c0_26 = arith.constant 0 : index
    %80 = vector.load %arg8[%79, %c0_25, %c0_26] : memref<8x8x128xbf16, #tpu.memory_space<vmem>>, vector<1x8x128xbf16>
    %81 = vector.shape_cast %80 : vector<1x8x128xbf16> to vector<8x128xbf16>
    %82 = arith.extf %81 : vector<8x128xbf16> to vector<8x128xf32>
    %83 = vector.broadcast %8 : vector<1x128xf32> to vector<8x128xf32>
    %84 = arith.addf %82, %83 : vector<8x128xf32>
    %85 = arith.truncf %78 : vector<8x32xf32> to vector<8x32xbf16>
    %cst_27 = arith.constant dense<0.000000e+00> : vector<8x128xf32>
    %86 = tpu.matmul %85, %7, %cst_27 {dimension_numbers = #tpu.dot_dimension_numbers<[1], [0], [0], [1], [0, 0, 1, 1], [], []>} : vector<8x32xbf16>, vector<32x128xbf16>, vector<8x128xf32> -> vector<8x128xf32>
    %87 = arith.addf %84, %86 : vector<8x128xf32>
    %88 = vector.extract_strided_slice %87 {offsets = [0, 0], sizes = [8, 32], strides = [1, 1]} : vector<8x128xf32> to vector<8x32xf32>
    %89 = arith.negf %88 : vector<8x32xf32>
    %90 = math.exp %89 : vector<8x32xf32>
    %cst_28 = arith.constant 1.000000e+00 : f32
    %91 = vector.broadcast %cst_28 : f32 to vector<8x32xf32>
    %92 = arith.addf %91, %90 : vector<8x32xf32>
    %93 = arith.divf %91, %92 : vector<8x32xf32>
    %94 = vector.extract_strided_slice %87 {offsets = [0, 32], sizes = [8, 32], strides = [1, 1]} : vector<8x128xf32> to vector<8x32xf32>
    %95 = arith.negf %94 : vector<8x32xf32>
    %96 = math.exp %95 : vector<8x32xf32>
    %cst_29 = arith.constant 1.000000e+00 : f32
    %97 = vector.broadcast %cst_29 : f32 to vector<8x32xf32>
    %98 = arith.addf %97, %96 : vector<8x32xf32>
    %99 = arith.divf %97, %98 : vector<8x32xf32>
    %100 = vector.extract_strided_slice %87 {offsets = [0, 64], sizes = [8, 32], strides = [1, 1]} : vector<8x128xf32> to vector<8x32xf32>
    %101 = math.tanh %100 : vector<8x32xf32>
    %102 = vector.extract_strided_slice %87 {offsets = [0, 96], sizes = [8, 32], strides = [1, 1]} : vector<8x128xf32> to vector<8x32xf32>
    %103 = arith.negf %102 : vector<8x32xf32>
    %104 = math.exp %103 : vector<8x32xf32>
    %cst_30 = arith.constant 1.000000e+00 : f32
    %105 = vector.broadcast %cst_30 : f32 to vector<8x32xf32>
    %106 = arith.addf %105, %104 : vector<8x32xf32>
    %107 = arith.divf %105, %106 : vector<8x32xf32>
    %108 = arith.mulf %99, %76 : vector<8x32xf32>
    %109 = arith.mulf %93, %101 : vector<8x32xf32>
    %110 = arith.addf %108, %109 : vector<8x32xf32>
    %111 = math.tanh %110 : vector<8x32xf32>
    %112 = arith.mulf %107, %111 : vector<8x32xf32>
    %c3_i32 = arith.constant 3 : i32
    %113 = arith.index_cast %c3_i32 : i32 to index
    %c0_31 = arith.constant 0 : index
    %c0_32 = arith.constant 0 : index
    %114 = vector.load %arg8[%113, %c0_31, %c0_32] : memref<8x8x128xbf16, #tpu.memory_space<vmem>>, vector<1x8x128xbf16>
    %115 = vector.shape_cast %114 : vector<1x8x128xbf16> to vector<8x128xbf16>
    %116 = arith.extf %115 : vector<8x128xbf16> to vector<8x128xf32>
    %117 = vector.broadcast %8 : vector<1x128xf32> to vector<8x128xf32>
    %118 = arith.addf %116, %117 : vector<8x128xf32>
    %119 = arith.truncf %112 : vector<8x32xf32> to vector<8x32xbf16>
    %cst_33 = arith.constant dense<0.000000e+00> : vector<8x128xf32>
    %120 = tpu.matmul %119, %7, %cst_33 {dimension_numbers = #tpu.dot_dimension_numbers<[1], [0], [0], [1], [0, 0, 1, 1], [], []>} : vector<8x32xbf16>, vector<32x128xbf16>, vector<8x128xf32> -> vector<8x128xf32>
    %121 = arith.addf %118, %120 : vector<8x128xf32>
    %122 = vector.extract_strided_slice %121 {offsets = [0, 0], sizes = [8, 32], strides = [1, 1]} : vector<8x128xf32> to vector<8x32xf32>
    %123 = arith.negf %122 : vector<8x32xf32>
    %124 = math.exp %123 : vector<8x32xf32>
    %cst_34 = arith.constant 1.000000e+00 : f32
    %125 = vector.broadcast %cst_34 : f32 to vector<8x32xf32>
    %126 = arith.addf %125, %124 : vector<8x32xf32>
    %127 = arith.divf %125, %126 : vector<8x32xf32>
    %128 = vector.extract_strided_slice %121 {offsets = [0, 32], sizes = [8, 32], strides = [1, 1]} : vector<8x128xf32> to vector<8x32xf32>
    %129 = arith.negf %128 : vector<8x32xf32>
    %130 = math.exp %129 : vector<8x32xf32>
    %cst_35 = arith.constant 1.000000e+00 : f32
    %131 = vector.broadcast %cst_35 : f32 to vector<8x32xf32>
    %132 = arith.addf %131, %130 : vector<8x32xf32>
    %133 = arith.divf %131, %132 : vector<8x32xf32>
    %134 = vector.extract_strided_slice %121 {offsets = [0, 64], sizes = [8, 32], strides = [1, 1]} : vector<8x128xf32> to vector<8x32xf32>
    %135 = math.tanh %134 : vector<8x32xf32>
    %136 = vector.extract_strided_slice %121 {offsets = [0, 96], sizes = [8, 32], strides = [1, 1]} : vector<8x128xf32> to vector<8x32xf32>
    %137 = arith.negf %136 : vector<8x32xf32>
    %138 = math.exp %137 : vector<8x32xf32>
    %cst_36 = arith.constant 1.000000e+00 : f32
    %139 = vector.broadcast %cst_36 : f32 to vector<8x32xf32>
    %140 = arith.addf %139, %138 : vector<8x32xf32>
    %141 = arith.divf %139, %140 : vector<8x32xf32>
    %142 = arith.mulf %133, %110 : vector<8x32xf32>
    %143 = arith.mulf %127, %135 : vector<8x32xf32>
    %144 = arith.addf %142, %143 : vector<8x32xf32>
    %145 = math.tanh %144 : vector<8x32xf32>
    %146 = arith.mulf %141, %145 : vector<8x32xf32>
    %c4_i32 = arith.constant 4 : i32
    %147 = arith.index_cast %c4_i32 : i32 to index
    %c0_37 = arith.constant 0 : index
    %c0_38 = arith.constant 0 : index
    %148 = vector.load %arg8[%147, %c0_37, %c0_38] : memref<8x8x128xbf16, #tpu.memory_space<vmem>>, vector<1x8x128xbf16>
    %149 = vector.shape_cast %148 : vector<1x8x128xbf16> to vector<8x128xbf16>
    %150 = arith.extf %149 : vector<8x128xbf16> to vector<8x128xf32>
    %151 = vector.broadcast %8 : vector<1x128xf32> to vector<8x128xf32>
    %152 = arith.addf %150, %151 : vector<8x128xf32>
    %153 = arith.truncf %146 : vector<8x32xf32> to vector<8x32xbf16>
    %cst_39 = arith.constant dense<0.000000e+00> : vector<8x128xf32>
    %154 = tpu.matmul %153, %7, %cst_39 {dimension_numbers = #tpu.dot_dimension_numbers<[1], [0], [0], [1], [0, 0, 1, 1], [], []>} : vector<8x32xbf16>, vector<32x128xbf16>, vector<8x128xf32> -> vector<8x128xf32>
    %155 = arith.addf %152, %154 : vector<8x128xf32>
    %156 = vector.extract_strided_slice %155 {offsets = [0, 0], sizes = [8, 32], strides = [1, 1]} : vector<8x128xf32> to vector<8x32xf32>
    %157 = arith.negf %156 : vector<8x32xf32>
    %158 = math.exp %157 : vector<8x32xf32>
    %cst_40 = arith.constant 1.000000e+00 : f32
    %159 = vector.broadcast %cst_40 : f32 to vector<8x32xf32>
    %160 = arith.addf %159, %158 : vector<8x32xf32>
    %161 = arith.divf %159, %160 : vector<8x32xf32>
    %162 = vector.extract_strided_slice %155 {offsets = [0, 32], sizes = [8, 32], strides = [1, 1]} : vector<8x128xf32> to vector<8x32xf32>
    %163 = arith.negf %162 : vector<8x32xf32>
    %164 = math.exp %163 : vector<8x32xf32>
    %cst_41 = arith.constant 1.000000e+00 : f32
    %165 = vector.broadcast %cst_41 : f32 to vector<8x32xf32>
    %166 = arith.addf %165, %164 : vector<8x32xf32>
    %167 = arith.divf %165, %166 : vector<8x32xf32>
    %168 = vector.extract_strided_slice %155 {offsets = [0, 64], sizes = [8, 32], strides = [1, 1]} : vector<8x128xf32> to vector<8x32xf32>
    %169 = math.tanh %168 : vector<8x32xf32>
    %170 = vector.extract_strided_slice %155 {offsets = [0, 96], sizes = [8, 32], strides = [1, 1]} : vector<8x128xf32> to vector<8x32xf32>
    %171 = arith.negf %170 : vector<8x32xf32>
    %172 = math.exp %171 : vector<8x32xf32>
    %cst_42 = arith.constant 1.000000e+00 : f32
    %173 = vector.broadcast %cst_42 : f32 to vector<8x32xf32>
    %174 = arith.addf %173, %172 : vector<8x32xf32>
    %175 = arith.divf %173, %174 : vector<8x32xf32>
    %176 = arith.mulf %167, %144 : vector<8x32xf32>
    %177 = arith.mulf %161, %169 : vector<8x32xf32>
    %178 = arith.addf %176, %177 : vector<8x32xf32>
    %179 = math.tanh %178 : vector<8x32xf32>
    %180 = arith.mulf %175, %179 : vector<8x32xf32>
    %c5_i32 = arith.constant 5 : i32
    %181 = arith.index_cast %c5_i32 : i32 to index
    %c0_43 = arith.constant 0 : index
    %c0_44 = arith.constant 0 : index
    %182 = vector.load %arg8[%181, %c0_43, %c0_44] : memref<8x8x128xbf16, #tpu.memory_space<vmem>>, vector<1x8x128xbf16>
    %183 = vector.shape_cast %182 : vector<1x8x128xbf16> to vector<8x128xbf16>
    %184 = arith.extf %183 : vector<8x128xbf16> to vector<8x128xf32>
    %185 = vector.broadcast %8 : vector<1x128xf32> to vector<8x128xf32>
    %186 = arith.addf %184, %185 : vector<8x128xf32>
    %187 = arith.truncf %180 : vector<8x32xf32> to vector<8x32xbf16>
    %cst_45 = arith.constant dense<0.000000e+00> : vector<8x128xf32>
    %188 = tpu.matmul %187, %7, %cst_45 {dimension_numbers = #tpu.dot_dimension_numbers<[1], [0], [0], [1], [0, 0, 1, 1], [], []>} : vector<8x32xbf16>, vector<32x128xbf16>, vector<8x128xf32> -> vector<8x128xf32>
    %189 = arith.addf %186, %188 : vector<8x128xf32>
    %190 = vector.extract_strided_slice %189 {offsets = [0, 0], sizes = [8, 32], strides = [1, 1]} : vector<8x128xf32> to vector<8x32xf32>
    %191 = arith.negf %190 : vector<8x32xf32>
    %192 = math.exp %191 : vector<8x32xf32>
    %cst_46 = arith.constant 1.000000e+00 : f32
    %193 = vector.broadcast %cst_46 : f32 to vector<8x32xf32>
    %194 = arith.addf %193, %192 : vector<8x32xf32>
    %195 = arith.divf %193, %194 : vector<8x32xf32>
    %196 = vector.extract_strided_slice %189 {offsets = [0, 32], sizes = [8, 32], strides = [1, 1]} : vector<8x128xf32> to vector<8x32xf32>
    %197 = arith.negf %196 : vector<8x32xf32>
    %198 = math.exp %197 : vector<8x32xf32>
    %cst_47 = arith.constant 1.000000e+00 : f32
    %199 = vector.broadcast %cst_47 : f32 to vector<8x32xf32>
    %200 = arith.addf %199, %198 : vector<8x32xf32>
    %201 = arith.divf %199, %200 : vector<8x32xf32>
    %202 = vector.extract_strided_slice %189 {offsets = [0, 64], sizes = [8, 32], strides = [1, 1]} : vector<8x128xf32> to vector<8x32xf32>
    %203 = math.tanh %202 : vector<8x32xf32>
    %204 = vector.extract_strided_slice %189 {offsets = [0, 96], sizes = [8, 32], strides = [1, 1]} : vector<8x128xf32> to vector<8x32xf32>
    %205 = arith.negf %204 : vector<8x32xf32>
    %206 = math.exp %205 : vector<8x32xf32>
    %cst_48 = arith.constant 1.000000e+00 : f32
    %207 = vector.broadcast %cst_48 : f32 to vector<8x32xf32>
    %208 = arith.addf %207, %206 : vector<8x32xf32>
    %209 = arith.divf %207, %208 : vector<8x32xf32>
    %210 = arith.mulf %201, %178 : vector<8x32xf32>
    %211 = arith.mulf %195, %203 : vector<8x32xf32>
    %212 = arith.addf %210, %211 : vector<8x32xf32>
    %213 = math.tanh %212 : vector<8x32xf32>
    %214 = arith.mulf %209, %213 : vector<8x32xf32>
    %c6_i32 = arith.constant 6 : i32
    %215 = arith.index_cast %c6_i32 : i32 to index
    %c0_49 = arith.constant 0 : index
    %c0_50 = arith.constant 0 : index
    %216 = vector.load %arg8[%215, %c0_49, %c0_50] : memref<8x8x128xbf16, #tpu.memory_space<vmem>>, vector<1x8x128xbf16>
    %217 = vector.shape_cast %216 : vector<1x8x128xbf16> to vector<8x128xbf16>
    %218 = arith.extf %217 : vector<8x128xbf16> to vector<8x128xf32>
    %219 = vector.broadcast %8 : vector<1x128xf32> to vector<8x128xf32>
    %220 = arith.addf %218, %219 : vector<8x128xf32>
    %221 = arith.truncf %214 : vector<8x32xf32> to vector<8x32xbf16>
    %cst_51 = arith.constant dense<0.000000e+00> : vector<8x128xf32>
    %222 = tpu.matmul %221, %7, %cst_51 {dimension_numbers = #tpu.dot_dimension_numbers<[1], [0], [0], [1], [0, 0, 1, 1], [], []>} : vector<8x32xbf16>, vector<32x128xbf16>, vector<8x128xf32> -> vector<8x128xf32>
    %223 = arith.addf %220, %222 : vector<8x128xf32>
    %224 = vector.extract_strided_slice %223 {offsets = [0, 0], sizes = [8, 32], strides = [1, 1]} : vector<8x128xf32> to vector<8x32xf32>
    %225 = arith.negf %224 : vector<8x32xf32>
    %226 = math.exp %225 : vector<8x32xf32>
    %cst_52 = arith.constant 1.000000e+00 : f32
    %227 = vector.broadcast %cst_52 : f32 to vector<8x32xf32>
    %228 = arith.addf %227, %226 : vector<8x32xf32>
    %229 = arith.divf %227, %228 : vector<8x32xf32>
    %230 = vector.extract_strided_slice %223 {offsets = [0, 32], sizes = [8, 32], strides = [1, 1]} : vector<8x128xf32> to vector<8x32xf32>
    %231 = arith.negf %230 : vector<8x32xf32>
    %232 = math.exp %231 : vector<8x32xf32>
    %cst_53 = arith.constant 1.000000e+00 : f32
    %233 = vector.broadcast %cst_53 : f32 to vector<8x32xf32>
    %234 = arith.addf %233, %232 : vector<8x32xf32>
    %235 = arith.divf %233, %234 : vector<8x32xf32>
    %236 = vector.extract_strided_slice %223 {offsets = [0, 64], sizes = [8, 32], strides = [1, 1]} : vector<8x128xf32> to vector<8x32xf32>
    %237 = math.tanh %236 : vector<8x32xf32>
    %238 = vector.extract_strided_slice %223 {offsets = [0, 96], sizes = [8, 32], strides = [1, 1]} : vector<8x128xf32> to vector<8x32xf32>
    %239 = arith.negf %238 : vector<8x32xf32>
    %240 = math.exp %239 : vector<8x32xf32>
    %cst_54 = arith.constant 1.000000e+00 : f32
    %241 = vector.broadcast %cst_54 : f32 to vector<8x32xf32>
    %242 = arith.addf %241, %240 : vector<8x32xf32>
    %243 = arith.divf %241, %242 : vector<8x32xf32>
    %244 = arith.mulf %235, %212 : vector<8x32xf32>
    %245 = arith.mulf %229, %237 : vector<8x32xf32>
    %246 = arith.addf %244, %245 : vector<8x32xf32>
    %247 = math.tanh %246 : vector<8x32xf32>
    %248 = arith.mulf %243, %247 : vector<8x32xf32>
    %c7_i32 = arith.constant 7 : i32
    %249 = arith.index_cast %c7_i32 : i32 to index
    %c0_55 = arith.constant 0 : index
    %c0_56 = arith.constant 0 : index
    %250 = vector.load %arg8[%249, %c0_55, %c0_56] : memref<8x8x128xbf16, #tpu.memory_space<vmem>>, vector<1x8x128xbf16>
    %251 = vector.shape_cast %250 : vector<1x8x128xbf16> to vector<8x128xbf16>
    %252 = arith.extf %251 : vector<8x128xbf16> to vector<8x128xf32>
    %253 = vector.broadcast %8 : vector<1x128xf32> to vector<8x128xf32>
    %254 = arith.addf %252, %253 : vector<8x128xf32>
    %255 = arith.truncf %248 : vector<8x32xf32> to vector<8x32xbf16>
    %cst_57 = arith.constant dense<0.000000e+00> : vector<8x128xf32>
    %256 = tpu.matmul %255, %7, %cst_57 {dimension_numbers = #tpu.dot_dimension_numbers<[1], [0], [0], [1], [0, 0, 1, 1], [], []>} : vector<8x32xbf16>, vector<32x128xbf16>, vector<8x128xf32> -> vector<8x128xf32>
    %257 = arith.addf %254, %256 : vector<8x128xf32>
    %258 = vector.extract_strided_slice %257 {offsets = [0, 0], sizes = [8, 32], strides = [1, 1]} : vector<8x128xf32> to vector<8x32xf32>
    %259 = arith.negf %258 : vector<8x32xf32>
    %260 = math.exp %259 : vector<8x32xf32>
    %cst_58 = arith.constant 1.000000e+00 : f32
    %261 = vector.broadcast %cst_58 : f32 to vector<8x32xf32>
    %262 = arith.addf %261, %260 : vector<8x32xf32>
    %263 = arith.divf %261, %262 : vector<8x32xf32>
    %264 = vector.extract_strided_slice %257 {offsets = [0, 32], sizes = [8, 32], strides = [1, 1]} : vector<8x128xf32> to vector<8x32xf32>
    %265 = arith.negf %264 : vector<8x32xf32>
    %266 = math.exp %265 : vector<8x32xf32>
    %cst_59 = arith.constant 1.000000e+00 : f32
    %267 = vector.broadcast %cst_59 : f32 to vector<8x32xf32>
    %268 = arith.addf %267, %266 : vector<8x32xf32>
    %269 = arith.divf %267, %268 : vector<8x32xf32>
    %270 = vector.extract_strided_slice %257 {offsets = [0, 64], sizes = [8, 32], strides = [1, 1]} : vector<8x128xf32> to vector<8x32xf32>
    %271 = math.tanh %270 : vector<8x32xf32>
    %272 = vector.extract_strided_slice %257 {offsets = [0, 96], sizes = [8, 32], strides = [1, 1]} : vector<8x128xf32> to vector<8x32xf32>
    %273 = arith.negf %272 : vector<8x32xf32>
    %274 = math.exp %273 : vector<8x32xf32>
    %cst_60 = arith.constant 1.000000e+00 : f32
    %275 = vector.broadcast %cst_60 : f32 to vector<8x32xf32>
    %276 = arith.addf %275, %274 : vector<8x32xf32>
    %277 = arith.divf %275, %276 : vector<8x32xf32>
    %278 = arith.mulf %269, %246 : vector<8x32xf32>
    %279 = arith.mulf %263, %271 : vector<8x32xf32>
    %280 = arith.addf %278, %279 : vector<8x32xf32>
    %281 = math.tanh %280 : vector<8x32xf32>
    %282 = arith.mulf %277, %281 : vector<8x32xf32>
    %c8_i32 = arith.constant 8 : i32
    %c0_61 = arith.constant 0 : index
    %c0_62 = arith.constant 0 : index
    %283 = vector.load %arg5[%c0_61, %c0_62] : memref<32x5xf32, #tpu.memory_space<vmem>>, vector<32x5xf32>
    %cst_63 = arith.constant dense<0.000000e+00> : vector<8x5xf32>
    %284 = tpu.matmul %282, %283, %cst_63 {dimension_numbers = #tpu.dot_dimension_numbers<[1], [0], [0], [1], [0, 0, 1, 1], [], []>} : vector<8x32xf32>, vector<32x5xf32>, vector<8x5xf32> -> vector<8x5xf32>
    %c0_64 = arith.constant 0 : index
    %c0_65 = arith.constant 0 : index
    %285 = vector.load %arg6[%c0_64, %c0_65] : memref<1x5xf32, #tpu.memory_space<vmem>>, vector<1x5xf32>
    %286 = vector.broadcast %285 : vector<1x5xf32> to vector<8x5xf32>
    %287 = arith.addf %284, %286 : vector<8x5xf32>
    %c0_66 = arith.constant 0 : index
    %c0_67 = arith.constant 0 : index
    %288 = vector.load %arg7[%c0_66, %c0_67] : memref<8x5xf32, #tpu.memory_space<vmem>>, vector<8x5xf32>
    tpu.vector_store %arg7[%c0_66, %c0_67], %287 {strides = array<i32>} : memref<8x5xf32, #tpu.memory_space<vmem>>, vector<8x5xf32>,
    return
  }
  func.func @transform_0(%arg0: i32) -> (i32, i32, i32) {
    %c0_i32 = arith.constant 0 : i32
    %c0_i32_0 = arith.constant 0 : i32
    %c0_i32_1 = arith.constant 0 : i32
    return %c0_i32, %arg0, %c0_i32_0 : i32, i32, i32
  }
  func.func @transform_1(%arg0: i32) -> (i32, i32) {
    %c0_i32 = arith.constant 0 : i32
    %c0_i32_0 = arith.constant 0 : i32
    %c0_i32_1 = arith.constant 0 : i32
    return %c0_i32, %c0_i32_0 : i32, i32
  }
  func.func @transform_2(%arg0: i32) -> (i32, i32) {
    %c0_i32 = arith.constant 0 : i32
    %c0_i32_0 = arith.constant 0 : i32
    %c0_i32_1 = arith.constant 0 : i32
    return %c0_i32, %c0_i32_0 : i32, i32
  }
  func.func @transform_3(%arg0: i32) -> (i32, i32) {
    %c0_i32 = arith.constant 0 : i32
    %c0_i32_0 = arith.constant 0 : i32
    %c0_i32_1 = arith.constant 0 : i32
    return %c0_i32, %c0_i32_0 : i32, i32
  }
  func.func @transform_4(%arg0: i32) -> (i32, i32) {
    %c0_i32 = arith.constant 0 : i32
    %c0_i32_0 = arith.constant 0 : i32
    %c0_i32_1 = arith.constant 0 : i32
    return %c0_i32, %c0_i32_0 : i32, i32
  }
  func.func @transform_5(%arg0: i32) -> (i32, i32) {
    %c0_i32 = arith.constant 0 : i32
    %c0_i32_0 = arith.constant 0 : i32
    %c0_i32_1 = arith.constant 0 : i32
    return %c0_i32, %c0_i32_0 : i32, i32
  }
  func.func @transform_6(%arg0: i32) -> (i32, i32) {
    %c0_i32 = arith.constant 0 : i32
    %c0_i32_0 = arith.constant 0 : i32
    return %arg0, %c0_i32 : i32, i32
  }
}

</mosaic_0001>

<llo_original>
// kernel: lstm_head_forward.1
$region0: #{lstm_head_forward.1}
  #allocation0 [shape = 'u32[]', space=smem, size = 0x4, offset = 0x4, fixed_abs, tag = 'smem constant byte address 0x4 - core index']
  #allocation1 [shape = 'u32[72,128]{1,0:T(1,128)}', space=vmem, size = 0x9000, scoped, tag = 'internal scratch']
  #allocation2 [shape = 'bf16[8,8,128]{2,1,0:T(8,128)(2,1)}', space=vmem, size = 0x4000, scoped, tag = 'scratch operand']
  %s0 = inlined_call_operand.vmem [shape: bf16[8,8,32], index: 0, kind: input, shape index: {}]
  %s1 = inlined_call_operand.vmem [shape: bf16[32,128], index: 1, kind: input, shape index: {}]
  %s2 = inlined_call_operand.vmem [shape: bf16[32,128], index: 2, kind: input, shape index: {}]
  %s3 = inlined_call_operand.vmem [shape: f32[1,128], index: 3, kind: input, shape index: {}]
  %s4 = inlined_call_operand.vmem [shape: f32[32,5], index: 4, kind: input, shape index: {}]
  %s5 = inlined_call_operand.vmem [shape: f32[1,5], index: 5, kind: input, shape index: {}]
  %s6 = inlined_call_operand.vmem [shape: f32[8,5], index: 6, kind: output, shape index: {}]
  %s7 = sld [smem:[#allocation0]]
  $region34: #{lstm_head_forward.1} parent=0
    _
  %s9 = ssub.s32 1, %s7
  %s10 = scalar_select 0, %s9, %s7
  // Predicated region
  $region2: #{lstm_head_forward.1} parent=0 // pred_check
    _
  $region3: #{lstm_head_forward.1} parent=0 // pred_check_branch
    %12 = sbr.rel (0) target = $region5
  $region4: #{lstm_head_forward.1} parent=0 // pred_region
    _
  $region5: #{lstm_head_forward.1} parent=0 // pred_fallthru
    _
  // Predicated region
  $region6: #{lstm_head_forward.1} parent=0 // pred_check
    _
  $region7: #{lstm_head_forward.1} parent=0 // pred_check_branch
    %14 = sbr.rel (0) target = $region9
  $region8: #{lstm_head_forward.1} parent=0 // pred_region
    _
  $region9: #{lstm_head_forward.1} parent=0 // pred_fallthru
    _
  // Predicated region
  $region10: #{lstm_head_forward.1} parent=0 // pred_check
    _
  $region11: #{lstm_head_forward.1} parent=0 // pred_check_branch
    %16 = sbr.rel (0) target = $region13
  $region12: #{lstm_head_forward.1} parent=0 // pred_region
    _
  $region13: #{lstm_head_forward.1} parent=0 // pred_fallthru
    _
  // Predicated region
  $region14: #{lstm_head_forward.1} parent=0 // pred_check
    _
  $region15: #{lstm_head_forward.1} parent=0 // pred_check_branch
    %18 = sbr.rel (0) target = $region17
  $region16: #{lstm_head_forward.1} parent=0 // pred_region
    _
  $region17: #{lstm_head_forward.1} parent=0 // pred_fallthru
    _
  // Predicated region
  $region18: #{lstm_head_forward.1} parent=0 // pred_check
    _
  $region19: #{lstm_head_forward.1} parent=0 // pred_check_branch
    %20 = sbr.rel (0) target = $region21
  $region20: #{lstm_head_forward.1} parent=0 // pred_region
    _
  $region21: #{lstm_head_forward.1} parent=0 // pred_fallthru
    _
  // Predicated region
  $region22: #{lstm_head_forward.1} parent=0 // pred_check
    _
  $region23: #{lstm_head_forward.1} parent=0 // pred_check_branch
    %22 = sbr.rel (0) target = $region25
  $region24: #{lstm_head_forward.1} parent=0 // pred_region
    _
  $region25: #{lstm_head_forward.1} parent=0 // pred_fallthru
    _
  %v24 = vld [vmem:[%s0] sm:$0xf]
  %v25 = vld [vmem:[%s0 + $0x4] sm:$0xf]
  %v26 = vld [vmem:[%s0 + $0x8] sm:$0xf]
  %v27 = vld [vmem:[%s0 + $0xc] sm:$0xf]
  %v28 = vld [vmem:[%s0 + $0x10] sm:$0xf]
  %v29 = vld [vmem:[%s0 + $0x14] sm:$0xf]
  %v30 = vld [vmem:[%s0 + $0x18] sm:$0xf]
  %v31 = vld [vmem:[%s0 + $0x1c] sm:$0xf]
  %v32 = vld [vmem:[%s1] sm:$0xf]
  %v33 = vld [vmem:[%s1 + $0x4] sm:$0xf]
  %v34 = vld [vmem:[%s1 + $0x8] sm:$0xf]
  %v35 = vld [vmem:[%s1 + $0xc] sm:$0xf]
  %v44 = vunpack.c.l.b16 %v24
  %v45 = vunpack.c.l.b16 %v25
  %v46 = vunpack.c.l.b16 %v26
  %v47 = vunpack.c.l.b16 %v27
  %v48 = vunpack.c.l.b16 %v28
  %v49 = vunpack.c.l.b16 %v29
  %v50 = vunpack.c.l.b16 %v30
  %v51 = vunpack.c.l.b16 %v31
  %v52 = vpack.c.b16 %v45, %v44
  %v53 = vpack.c.b16 %v47, %v46
  %v54 = vpack.c.b16 %v49, %v48
  %v55 = vpack.c.b16 %v51, %v50
  %v60 = vunpack.c.l.b16 %v32
  %v61 = vunpack.c.l.b16 %v33
  %v62 = vunpack.c.l.b16 %v34
  %v63 = vunpack.c.l.b16 %v35
  %v64 = vpack.c.b16 %v61, %v60
  %v65 = vpack.c.b16 %v63, %v62
  %vm68 = vcmask 261120
  %v70 = vsel %vm68, %v52, 0
  %v73 = vsel %vm68, %v53, 0
  %v76 = vsel %vm68, %v54, 0
  %v79 = vsel %vm68, %v55, 0
  %81 = vmatpush.bf16.msra.mxu0 0
  %82 = vmatpush.bf16.msra.mxu0 0
  %83 = vmatpush.bf16.msra.mxu0 0
  %84 = vmatpush.bf16.msra.mxu0 0
  %85 = vmatpush.bf16.msra.mxu0 0
  %86 = vmatpush.bf16.msra.mxu0 0
  %87 = vmatpush.bf16.msra.mxu0 %v65
  %88 = vmatpush.bf16.msra.mxu0 %v64
  %89 = vmatmul.bf16.gmra.mxu0 %v70
  %v90 = vpop.f32.mrf.mxu0
  %v91 = vadd.f32 0.0, %v90
  %v92 = vpop.f32.mrf.mxu0
  %v93 = vadd.f32 0.0, %v92
  %94 = vmatmul.bf16.gmra.mxu0 %v73
  %v95 = vpop.f32.mrf.mxu0
  %v96 = vadd.f32 0.0, %v95
  %v97 = vpop.f32.mrf.mxu0
  %v98 = vadd.f32 0.0, %v97
  %99 = vmatmul.bf16.gmra.mxu0 %v76
  %v100 = vpop.f32.mrf.mxu0
  %v101 = vadd.f32 0.0, %v100
  %v102 = vpop.f32.mrf.mxu0
  %v103 = vadd.f32 0.0, %v102
  %104 = vmatmul.bf16.gmra.mxu0 %v79
  %v105 = vpop.f32.mrf.mxu0
  %v106 = vadd.f32 0.0, %v105
  %v107 = vpop.f32.mrf.mxu0
  %v108 = vadd.f32 0.0, %v107
  %109 = vdwg.mxu0
  %v110 = vpack.c.bf16 %v91, %v91
  %v111 = vpack.c.bf16 %v93, %v93
  %v112 = vpack.c.bf16 %v96, %v96
  %v113 = vpack.c.bf16 %v98, %v98
  %v114 = vpack.c.bf16 %v101, %v101
  %v115 = vpack.c.bf16 %v103, %v103
  %v116 = vpack.c.bf16 %v106, %v106
  %v117 = vpack.c.bf16 %v108, %v108
  %118 = vst [vmem:[#allocation2] sm:$0xf] %v110
  %119 = vst [vmem:[#allocation2 + $0x4] sm:$0xf] %v111
  %120 = vst [vmem:[#allocation2 + $0x8] sm:$0xf] %v112
  %121 = vst [vmem:[#allocation2 + $0xc] sm:$0xf] %v113
  %122 = vst [vmem:[#allocation2 + $0x10] sm:$0xf] %v114
  %123 = vst [vmem:[#allocation2 + $0x14] sm:$0xf] %v115
  %124 = vst [vmem:[#allocation2 + $0x18] sm:$0xf] %v116
  %125 = vst [vmem:[#allocation2 + $0x1c] sm:$0xf] %v117
  %v126 = vld [vmem:[%s2] sm:$0xf]
  %v127 = vld [vmem:[%s2 + $0x4] sm:$0xf]
  %v128 = vld [vmem:[%s2 + $0x8] sm:$0xf]
  %v129 = vld [vmem:[%s2 + $0xc] sm:$0xf]
  %v130 = vld [vmem:[%s3] sm:$0x1]
  %v131 = vld [vmem:[#allocation2] sm:$0xf]
  %v132 = vunpack.c.l.bf16 %v131
  %v134 = vperm.slane %v130, 0
  %v136 = vadd.f32 %v132, %v134
  %v141 = vunpack.c.l.b16 %v126
  %v142 = vunpack.c.l.b16 %v127
  %v143 = vunpack.c.l.b16 %v128
  %v144 = vunpack.c.l.b16 %v129
  %v145 = vpack.c.b16 %v142, %v141
  %v146 = vpack.c.b16 %v144, %v143
  %v150 = vsel %vm68, 0, 0
  %152 = vmatpush.bf16.msra.mxu0 0
  %153 = vmatpush.bf16.msra.mxu0 0
  %154 = vmatpush.bf16.msra.mxu0 0
  %155 = vmatpush.bf16.msra.mxu0 0
  %156 = vmatpush.bf16.msra.mxu0 0
  %157 = vmatpush.bf16.msra.mxu0 0
  %158 = vmatpush.bf16.msra.mxu0 %v146
  %159 = vmatpush.bf16.msra.mxu0 %v145
  %160 = vmatmul.bf16.gmra.mxu0 %v150
  %v161 = vpop.f32.mrf.mxu0
  %v162 = vadd.f32 0.0, %v161
  %v163 = vpop.f32.mrf.mxu0
  %164 = vdwg.mxu0
  %v165 = vadd.f32 %v136, %v162
  %v166 = vxor.u32 %v165, 2147483648
  %v167 = vmul.f32 %v166, 1.442695
  %v168 = vpow.pop %v167
  %v169 = vadd.f32 %v168, 1.0
  %v170 = vrcp.pop %v169
  %v171 = vmul.f32 %v169, %v170
  %v172 = vsub.f32 1.0, %v171
  %v173 = vmul.f32 %v170, %v172
  %v174 = vadd.f32 %v170, %v173
  %vm175 = vweird.f32 %v169
  %vm176 = vweird.f32 %v170
  %vm177 = vmor %vm175, %vm176
  %v178 = vsel %vm177, %v170, %v174
  %v179 = vand.u32 2147483647, %v169
  %vm180 = vcmp.eq.f32.partialorder %v179, 8.507059e+37
  %v181 = vand.u32 %v169, 2147483648
  %v182 = vor.u32 1.1754944e-38, %v181
  %v183 = vsel %vm180, %v182, %v178
  %v184 = vmul.f32 1.0, %v183
  %v185 = vtanh.pop %v165
  %v186 = vmul.f32 %v184, 0.0
  %188 = vrot.lane.b32.xlu0 %v185, 64
  %v189 = vpop.permute.xlu0 %188
  %v191 = vmul.f32 %v184, %v189
  %193 = vrot.lane.b32.xlu0 %v191, 32
  %v194 = vpop.permute.xlu0 %193
  %v196 = vadd.f32 %v186, %v194
  %v197 = vtanh.pop %v196
  %199 = vrot.lane.b32.xlu0 %v197, 64
  %v200 = vpop.permute.xlu0 %199
  %v202 = vmul.f32 %v184, %v200
  %s203 = scalar_lea.vmem [#allocation2], 4
  %v204 = vld [vmem:[%s203] sm:$0xf]
  %v205 = vunpack.c.l.bf16 %v204
  %v206 = vadd.f32 %v205, %v134
  %v207 = vpack.c.bf16 %v202, %v202
  %209 = vrot.lane.b32.xlu0 %v207, 32
  %v210 = vpop.permute.xlu0 %209
  %v212 = vsel %vm68, %v210, 0
  %214 = vmatpush.bf16.msra.mxu0 0
  %215 = vmatpush.bf16.msra.mxu0 0
  %216 = vmatpush.bf16.msra.mxu0 0
  %217 = vmatpush.bf16.msra.mxu0 0
  %218 = vmatpush.bf16.msra.mxu0 0
  %219 = vmatpush.bf16.msra.mxu0 0
  %220 = vmatpush.bf16.msra.mxu0 %v146
  %221 = vmatpush.bf16.msra.mxu0 %v145
  %222 = vmatmul.bf16.gmra.mxu0 %v212
  %v223 = vpop.f32.mrf.mxu0
  %v224 = vadd.f32 0.0, %v223
  %v225 = vpop.f32.mrf.mxu0
  %226 = vdwg.mxu0
  %v227 = vadd.f32 %v206, %v224
  %v228 = vxor.u32 %v227, 2147483648
  %v229 = vmul.f32 %v228, 1.442695
  %v230 = vpow.pop %v229
  %v231 = vadd.f32 %v230, 1.0
  %v232 = vrcp.pop %v231
  %v233 = vmul.f32 %v231, %v232
  %v234 = vsub.f32 1.0, %v233
  %v235 = vmul.f32 %v232, %v234
  %v236 = vadd.f32 %v232, %v235
  %vm237 = vweird.f32 %v231
  %vm238 = vweird.f32 %v232
  %vm239 = vmor %vm237, %vm238
  %v240 = vsel %vm239, %v232, %v236
  %v241 = vand.u32 2147483647, %v231
  %vm242 = vcmp.eq.f32.partialorder %v241, 8.507059e+37
  %v243 = vand.u32 %v231, 2147483648
  %v244 = vor.u32 1.1754944e-38, %v243
  %v245 = vsel %vm242, %v244, %v240
  %v246 = vmul.f32 1.0, %v245
  %v247 = vtanh.pop %v227
  %v248 = vmul.f32 %v246, %v196
  %250 = vrot.lane.b32.xlu0 %v247, 64
  %v251 = vpop.permute.xlu0 %250
  %v253 = vmul.f32 %v246, %v251
  %255 = vrot.lane.b32.xlu0 %v253, 32
  %v256 = vpop.permute.xlu0 %255
  %v258 = vadd.f32 %v248, %v256
  %v259 = vtanh.pop %v258
  %261 = vrot.lane.b32.xlu0 %v259, 64
  %v262 = vpop.permute.xlu0 %261
  %v264 = vmul.f32 %v246, %v262
  %s265 = scalar_lea.vmem [#allocation2], 8
  %v266 = vld [vmem:[%s265] sm:$0xf]
  %v267 = vunpack.c.l.bf16 %v266
  %v268 = vadd.f32 %v267, %v134
  %v269 = vpack.c.bf16 %v264, %v264
  %271 = vrot.lane.b32.xlu0 %v269, 32
  %v272 = vpop.permute.xlu0 %271
  %v274 = vsel %vm68, %v272, 0
  %276 = vmatpush.bf16.msra.mxu0 0
  %277 = vmatpush.bf16.msra.mxu0 0
  %278 = vmatpush.bf16.msra.mxu0 0
  %279 = vmatpush.bf16.msra.mxu0 0
  %280 = vmatpush.bf16.msra.mxu0 0
  %281 = vmatpush.bf16.msra.mxu0 0
  %282 = vmatpush.bf16.msra.mxu0 %v146
  %283 = vmatpush.bf16.msra.mxu0 %v145
  %284 = vmatmul.bf16.gmra.mxu0 %v274
  %v285 = vpop.f32.mrf.mxu0
  %v286 = vadd.f32 0.0, %v285
  %v287 = vpop.f32.mrf.mxu0
  %288 = vdwg.mxu0
  %v289 = vadd.f32 %v268, %v286
  %v290 = vxor.u32 %v289, 2147483648
  %v291 = vmul.f32 %v290, 1.442695
  %v292 = vpow.pop %v291
  %v293 = vadd.f32 %v292, 1.0
  %v294 = vrcp.pop %v293
  %v295 = vmul.f32 %v293, %v294
  %v296 = vsub.f32 1.0, %v295
  %v297 = vmul.f32 %v294, %v296
  %v298 = vadd.f32 %v294, %v297
  %vm299 = vweird.f32 %v293
  %vm300 = vweird.f32 %v294
  %vm301 = vmor %vm299, %vm300
  %v302 = vsel %vm301, %v294, %v298
  %v303 = vand.u32 2147483647, %v293
  %vm304 = vcmp.eq.f32.partialorder %v303, 8.507059e+37
  %v305 = vand.u32 %v293, 2147483648
  %v306 = vor.u32 1.1754944e-38, %v305
  %v307 = vsel %vm304, %v306, %v302
  %v308 = vmul.f32 1.0, %v307
  %v309 = vtanh.pop %v289
  %v310 = vmul.f32 %v308, %v258
  %312 = vrot.lane.b32.xlu0 %v309, 64
  %v313 = vpop.permute.xlu0 %312
  %v315 = vmul.f32 %v308, %v313
  %317 = vrot.lane.b32.xlu0 %v315, 32
  %v318 = vpop.permute.xlu0 %317
  %v320 = vadd.f32 %v310, %v318
  %v321 = vtanh.pop %v320
  %323 = vrot.lane.b32.xlu0 %v321, 64
  %v324 = vpop.permute.xlu0 %323
  %v326 = vmul.f32 %v308, %v324
  %s327 = scalar_lea.vmem [#allocation2], 12
  %v328 = vld [vmem:[%s327] sm:$0xf]
  %v329 = vunpack.c.l.bf16 %v328
  %v330 = vadd.f32 %v329, %v134
  %v331 = vpack.c.bf16 %v326, %v326
  %333 = vrot.lane.b32.xlu0 %v331, 32
  %v334 = vpop.permute.xlu0 %333
  %v336 = vsel %vm68, %v334, 0
  %338 = vmatpush.bf16.msra.mxu0 0
  %339 = vmatpush.bf16.msra.mxu0 0
  %340 = vmatpush.bf16.msra.mxu0 0
  %341 = vmatpush.bf16.msra.mxu0 0
  %342 = vmatpush.bf16.msra.mxu0 0
  %343 = vmatpush.bf16.msra.mxu0 0
  %344 = vmatpush.bf16.msra.mxu0 %v146
  %345 = vmatpush.bf16.msra.mxu0 %v145
  %346 = vmatmul.bf16.gmra.mxu0 %v336
  %v347 = vpop.f32.mrf.mxu0
  %v348 = vadd.f32 0.0, %v347
  %v349 = vpop.f32.mrf.mxu0
  %350 = vdwg.mxu0
  %v351 = vadd.f32 %v330, %v348
  %v352 = vxor.u32 %v351, 2147483648
  %v353 = vmul.f32 %v352, 1.442695
  %v354 = vpow.pop %v353
  %v355 = vadd.f32 %v354, 1.0
  %v356 = vrcp.pop %v355
  %v357 = vmul.f32 %v355, %v356
  %v358 = vsub.f32 1.0, %v357
  %v359 = vmul.f32 %v356, %v358
  %v360 = vadd.f32 %v356, %v359
  %vm361 = vweird.f32 %v355
  %vm362 = vweird.f32 %v356
  %vm363 = vmor %vm361, %vm362
  %v364 = vsel %vm363, %v356, %v360
  %v365 = vand.u32 2147483647, %v355
  %vm366 = vcmp.eq.f32.partialorder %v365, 8.507059e+37
  %v367 = vand.u32 %v355, 2147483648
  %v368 = vor.u32 1.1754944e-38, %v367
  %v369 = vsel %vm366, %v368, %v364
  %v370 = vmul.f32 1.0, %v369
  %v371 = vtanh.pop %v351
  %v372 = vmul.f32 %v370, %v320
  %374 = vrot.lane.b32.xlu0 %v371, 64
  %v375 = vpop.permute.xlu0 %374
  %v377 = vmul.f32 %v370, %v375
  %379 = vrot.lane.b32.xlu0 %v377, 32
  %v380 = vpop.permute.xlu0 %379
  %v382 = vadd.f32 %v372, %v380
  %v383 = vtanh.pop %v382
  %385 = vrot.lane.b32.xlu0 %v383, 64
  %v386 = vpop.permute.xlu0 %385
  %v388 = vmul.f32 %v370, %v386
  %s389 = scalar_lea.vmem [#allocation2], 16
  %v390 = vld [vmem:[%s389] sm:$0xf]
  %v391 = vunpack.c.l.bf16 %v390
  %v392 = vadd.f32 %v391, %v134
  %v393 = vpack.c.bf16 %v388, %v388
  %395 = vrot.lane.b32.xlu0 %v393, 32
  %v396 = vpop.permute.xlu0 %395
  %v398 = vsel %vm68, %v396, 0
  %400 = vmatpush.bf16.msra.mxu0 0
  %401 = vmatpush.bf16.msra.mxu0 0
  %402 = vmatpush.bf16.msra.mxu0 0
  %403 = vmatpush.bf16.msra.mxu0 0
  %404 = vmatpush.bf16.msra.mxu0 0
  %405 = vmatpush.bf16.msra.mxu0 0
  %406 = vmatpush.bf16.msra.mxu0 %v146
  %407 = vmatpush.bf16.msra.mxu0 %v145
  %408 = vmatmul.bf16.gmra.mxu0 %v398
  %v409 = vpop.f32.mrf.mxu0
  %v410 = vadd.f32 0.0, %v409
  %v411 = vpop.f32.mrf.mxu0
  %412 = vdwg.mxu0
  %v413 = vadd.f32 %v392, %v410
  %v414 = vxor.u32 %v413, 2147483648
  %v415 = vmul.f32 %v414, 1.442695
  %v416 = vpow.pop %v415
  %v417 = vadd.f32 %v416, 1.0
  %v418 = vrcp.pop %v417
  %v419 = vmul.f32 %v417, %v418
  %v420 = vsub.f32 1.0, %v419
  %v421 = vmul.f32 %v418, %v420
  %v422 = vadd.f32 %v418, %v421
  %vm423 = vweird.f32 %v417
  %vm424 = vweird.f32 %v418
  %vm425 = vmor %vm423, %vm424
  %v426 = vsel %vm425, %v418, %v422
  %v427 = vand.u32 2147483647, %v417
  %vm428 = vcmp.eq.f32.partialorder %v427, 8.507059e+37
  %v429 = vand.u32 %v417, 2147483648
  %v430 = vor.u32 1.1754944e-38, %v429
  %v431 = vsel %vm428, %v430, %v426
  %v432 = vmul.f32 1.0, %v431
  %v433 = vtanh.pop %v413
  %v434 = vmul.f32 %v432, %v382
  %436 = vrot.lane.b32.xlu0 %v433, 64
  %v437 = vpop.permute.xlu0 %436
  %v439 = vmul.f32 %v432, %v437
  %441 = vrot.lane.b32.xlu0 %v439, 32
  %v442 = vpop.permute.xlu0 %441
  %v444 = vadd.f32 %v434, %v442
  %v445 = vtanh.pop %v444
  %447 = vrot.lane.b32.xlu0 %v445, 64
  %v448 = vpop.permute.xlu0 %447
  %v450 = vmul.f32 %v432, %v448
  %s451 = scalar_lea.vmem [#allocation2], 20
  %v452 = vld [vmem:[%s451] sm:$0xf]
  %v453 = vunpack.c.l.bf16 %v452
  %v454 = vadd.f32 %v453, %v134
  %v455 = vpack.c.bf16 %v450, %v450
  %457 = vrot.lane.b32.xlu0 %v455, 32
  %v458 = vpop.permute.xlu0 %457
  %v460 = vsel %vm68, %v458, 0
  %462 = vmatpush.bf16.msra.mxu0 0
  %463 = vmatpush.bf16.msra.mxu0 0
  %464 = vmatpush.bf16.msra.mxu0 0
  %465 = vmatpush.bf16.msra.mxu0 0
  %466 = vmatpush.bf16.msra.mxu0 0
  %467 = vmatpush.bf16.msra.mxu0 0
  %468 = vmatpush.bf16.msra.mxu0 %v146
  %469 = vmatpush.bf16.msra.mxu0 %v145
  %470 = vmatmul.bf16.gmra.mxu0 %v460
  %v471 = vpop.f32.mrf.mxu0
  %v472 = vadd.f32 0.0, %v471
  %v473 = vpop.f32.mrf.mxu0
  %474 = vdwg.mxu0
  %v475 = vadd.f32 %v454, %v472
  %v476 = vxor.u32 %v475, 2147483648
  %v477 = vmul.f32 %v476, 1.442695
  %v478 = vpow.pop %v477
  %v479 = vadd.f32 %v478, 1.0
  %v480 = vrcp.pop %v479
  %v481 = vmul.f32 %v479, %v480
  %v482 = vsub.f32 1.0, %v481
  %v483 = vmul.f32 %v480, %v482
  %v484 = vadd.f32 %v480, %v483
  %vm485 = vweird.f32 %v479
  %vm486 = vweird.f32 %v480
  %vm487 = vmor %vm485, %vm486
  %v488 = vsel %vm487, %v480, %v484
  %v489 = vand.u32 2147483647, %v479
  %vm490 = vcmp.eq.f32.partialorder %v489, 8.507059e+37
  %v491 = vand.u32 %v479, 2147483648
  %v492 = vor.u32 1.1754944e-38, %v491
  %v493 = vsel %vm490, %v492, %v488
  %v494 = vmul.f32 1.0, %v493
  %v495 = vtanh.pop %v475
  %v496 = vmul.f32 %v494, %v444
  %498 = vrot.lane.b32.xlu0 %v495, 64
  %v499 = vpop.permute.xlu0 %498
  %v501 = vmul.f32 %v494, %v499
  %503 = vrot.lane.b32.xlu0 %v501, 32
  %v504 = vpop.permute.xlu0 %503
  %v506 = vadd.f32 %v496, %v504
  %v507 = vtanh.pop %v506
  %509 = vrot.lane.b32.xlu0 %v507, 64
  %v510 = vpop.permute.xlu0 %509
  %v512 = vmul.f32 %v494, %v510
  %s513 = scalar_lea.vmem [#allocation2], 24
  %v514 = vld [vmem:[%s513] sm:$0xf]
  %v515 = vunpack.c.l.bf16 %v514
  %v516 = vadd.f32 %v515, %v134
  %v517 = vpack.c.bf16 %v512, %v512
  %519 = vrot.lane.b32.xlu0 %v517, 32
  %v520 = vpop.permute.xlu0 %519
  %v522 = vsel %vm68, %v520, 0
  %524 = vmatpush.bf16.msra.mxu0 0
  %525 = vmatpush.bf16.msra.mxu0 0
  %526 = vmatpush.bf16.msra.mxu0 0
  %527 = vmatpush.bf16.msra.mxu0 0
  %528 = vmatpush.bf16.msra.mxu0 0
  %529 = vmatpush.bf16.msra.mxu0 0
  %530 = vmatpush.bf16.msra.mxu0 %v146
  %531 = vmatpush.bf16.msra.mxu0 %v145
  %532 = vmatmul.bf16.gmra.mxu0 %v522
  %v533 = vpop.f32.mrf.mxu0
  %v534 = vadd.f32 0.0, %v533
  %v535 = vpop.f32.mrf.mxu0
  %536 = vdwg.mxu0
  %v537 = vadd.f32 %v516, %v534
  %v538 = vxor.u32 %v537, 2147483648
  %v539 = vmul.f32 %v538, 1.442695
  %v540 = vpow.pop %v539
  %v541 = vadd.f32 %v540, 1.0
  %v542 = vrcp.pop %v541
  %v543 = vmul.f32 %v541, %v542
  %v544 = vsub.f32 1.0, %v543
  %v545 = vmul.f32 %v542, %v544
  %v546 = vadd.f32 %v542, %v545
  %vm547 = vweird.f32 %v541
  %vm548 = vweird.f32 %v542
  %vm549 = vmor %vm547, %vm548
  %v550 = vsel %vm549, %v542, %v546
  %v551 = vand.u32 2147483647, %v541
  %vm552 = vcmp.eq.f32.partialorder %v551, 8.507059e+37
  %v553 = vand.u32 %v541, 2147483648
  %v554 = vor.u32 1.1754944e-38, %v553
  %v555 = vsel %vm552, %v554, %v550
  %v556 = vmul.f32 1.0, %v555
  %v557 = vtanh.pop %v537
  %v558 = vmul.f32 %v556, %v506
  %560 = vrot.lane.b32.xlu0 %v557, 64
  %v561 = vpop.permute.xlu0 %560
  %v563 = vmul.f32 %v556, %v561
  %565 = vrot.lane.b32.xlu0 %v563, 32
  %v566 = vpop.permute.xlu0 %565
  %v568 = vadd.f32 %v558, %v566
  %v569 = vtanh.pop %v568
  %571 = vrot.lane.b32.xlu0 %v569, 64
  %v572 = vpop.permute.xlu0 %571
  %v574 = vmul.f32 %v556, %v572
  %s575 = scalar_lea.vmem [#allocation2], 28
  %v576 = vld [vmem:[%s575] sm:$0xf]
  %v577 = vunpack.c.l.bf16 %v576
  %v578 = vadd.f32 %v577, %v134
  %v579 = vpack.c.bf16 %v574, %v574
  %581 = vrot.lane.b32.xlu0 %v579, 32
  %v582 = vpop.permute.xlu0 %581
  %v584 = vsel %vm68, %v582, 0
  %586 = vmatpush.bf16.msra.mxu0 0
  %587 = vmatpush.bf16.msra.mxu0 0
  %588 = vmatpush.bf16.msra.mxu0 0
  %589 = vmatpush.bf16.msra.mxu0 0
  %590 = vmatpush.bf16.msra.mxu0 0
  %591 = vmatpush.bf16.msra.mxu0 0
  %592 = vmatpush.bf16.msra.mxu0 %v146
  %593 = vmatpush.bf16.msra.mxu0 %v145
  %594 = vmatmul.bf16.gmra.mxu0 %v584
  %v595 = vpop.f32.mrf.mxu0
  %v596 = vadd.f32 0.0, %v595
  %v597 = vpop.f32.mrf.mxu0
  %598 = vdwg.mxu0
  %v599 = vadd.f32 %v578, %v596
  %v600 = vxor.u32 %v599, 2147483648
  %v601 = vmul.f32 %v600, 1.442695
  %v602 = vpow.pop %v601
  %v603 = vadd.f32 %v602, 1.0
  %v604 = vrcp.pop %v603
  %v605 = vmul.f32 %v603, %v604
  %v606 = vsub.f32 1.0, %v605
  %v607 = vmul.f32 %v604, %v606
  %v608 = vadd.f32 %v604, %v607
  %vm609 = vweird.f32 %v603
  %vm610 = vweird.f32 %v604
  %vm611 = vmor %vm609, %vm610
  %v612 = vsel %vm611, %v604, %v608
  %v613 = vand.u32 2147483647, %v603
  %vm614 = vcmp.eq.f32.partialorder %v613, 8.507059e+37
  %v615 = vand.u32 %v603, 2147483648
  %v616 = vor.u32 1.1754944e-38, %v615
  %v617 = vsel %vm614, %v616, %v612
  %v618 = vmul.f32 1.0, %v617
  %v619 = vtanh.pop %v599
  %v620 = vmul.f32 %v618, %v568
  %622 = vrot.lane.b32.xlu0 %v619, 64
  %v623 = vpop.permute.xlu0 %622
  %v625 = vmul.f32 %v618, %v623
  %627 = vrot.lane.b32.xlu0 %v625, 32
  %v628 = vpop.permute.xlu0 %627
  %v630 = vadd.f32 %v620, %v628
  %v631 = vtanh.pop %v630
  %633 = vrot.lane.b32.xlu0 %v631, 64
  %v634 = vpop.permute.xlu0 %633
  %v636 = vmul.f32 %v618, %v634
  %v637 = vld [vmem:[%s4] sm:$0xff]
  %v638 = vld [vmem:[%s4 + $0x8] sm:$0xff]
  %v639 = vld [vmem:[%s4 + $0x10] sm:$0xff]
  %v640 = vld [vmem:[%s4 + $0x18] sm:$0xff]
  %v641 = vld [vmem:[%s5] sm:$0x1]
  %v643 = vperm.slane %v641, 0
  %646 = vrot.lane.b32.xlu0 %v636, 32
  %v647 = vpop.permute.xlu0 %646
  %v648 = vsel %vm68, %v647, 0
  %650 = vmatpush.msra.mxu0 0.0
  %651 = vmatpush.msra.mxu0 0.0
  %652 = vmatpush.msra.mxu0 0.0
  %653 = vmatpush.msra.mxu0 0.0
  %654 = vmatpush.msra.mxu0 0.0
  %655 = vmatpush.msra.mxu0 0.0
  %656 = vmatpush.msra.mxu0 0.0
  %657 = vmatpush.msra.mxu0 0.0
  %658 = vmatpush.msra.mxu0 0.0
  %659 = vmatpush.msra.mxu0 0.0
  %660 = vmatpush.msra.mxu0 0.0
  %661 = vmatpush.msra.mxu0 0.0
  %662 = vmatpush.msra.mxu0 %v640
  %663 = vmatpush.msra.mxu0 %v639
  %664 = vmatpush.msra.mxu0 %v638
  %665 = vmatpush.msra.mxu0 %v637
  %666 = vmatmul.f32.gmra.mxu0 %v648
  %v667 = vpop.f32.mrf.mxu0
  %v668 = vadd.f32 %v643, %v667
  %669 = vdwg.mxu0
  %vm670 = vcmask 39936
  %671 = vst.msk [vmem:[%s6] sm:$0xff] %vm670, %v668
  // Predicated region
  $region26: #{lstm_head_forward.1} parent=0 // pred_check
    _
  $region27: #{lstm_head_forward.1} parent=0 // pred_check_branch
    %673 = sbr.rel (0) target = $region29
  $region28: #{lstm_head_forward.1} parent=0 // pred_region
    _
  $region29: #{lstm_head_forward.1} parent=0 // pred_fallthru
    _
  // Predicated region
  $region30: #{lstm_head_forward.1} parent=0 // pred_check
    _
  $region31: #{lstm_head_forward.1} parent=0 // pred_check_branch
    %675 = sbr.rel (0) target = $region33
  $region32: #{lstm_head_forward.1} parent=0 // pred_region
    _
  $region33: #{lstm_head_forward.1} parent=0 // pred_fallthru
    _

</llo_original>
